<compile_context>
chip_gen: v6e
topology: v6e:2x2x1
jax: 0.10.0
libtpu: 0.0.40
codegen_flags: <defaults>
</compile_context>

<pallas_src>
import jax
import jax.numpy as jnp
from jax.experimental import pallas as pl
from jax.experimental.pallas import tpu as pltpu


def _round_up(x: int, m: int) -> int:
    return ((x + m - 1) // m) * m


def mlp_policy_kernel(obs_ref, w0_ref, b0_ref, w1_ref, b1_ref,
                      w2_ref, b2_ref, mean_ref):
    # obs tile: [TB, ob_dim] bf16 (cast done in the wrapper).
    # MXU matmuls in bf16 with f32 accumulation; bias/tanh math in f32.
    x = obs_ref[...]
    h = jnp.tanh(
        jnp.dot(x, w0_ref[...], preferred_element_type=jnp.float32)
        + b0_ref[...]
    )
    h = jnp.tanh(
        jnp.dot(h.astype(jnp.bfloat16), w1_ref[...],
                preferred_element_type=jnp.float32)
        + b1_ref[...]
    )
    mean_ref[...] = (
        jnp.dot(h.astype(jnp.bfloat16), w2_ref[...],
                preferred_element_type=jnp.float32)
        + b2_ref[...]
    )


def mlp_policy_forward(obs, params, *, tile_b: int = 1024):
    """MLPPolicy (continuous) forward in a single tiled Pallas kernel.

    Returns (mean [B, ac_dim] f32, std [1, ac_dim] f32) — the parameters of
    distributions.Normal(loc=mean, scale=std).
    """
    w0, b0, w1, b1, w2, b2, logstd = params
    B, ob_dim = obs.shape
    H = w0.shape[1]
    ac_dim = w2.shape[1]

    # Batch tile: multiple of 8 (sublane grain), no bigger than the batch.
    TB = _round_up(max(1, min(tile_b, B)), 8)
    # Pad batch only to the 8-sublane grain; the grid handles a partial last
    # tile (out-of-range rows are row-independent garbage that is never
    # written back).
    B_p = _round_up(B, 8)
    grid = (pl.cdiv(B_p, TB),)

    # Hidden dim padded to the 128-lane grain (weights are tiny + resident,
    # so this costs nothing on the streamed side and keeps `h` lane-dense).
    H_p = _round_up(H, 128)

    # Streamed input: bf16 obs, real feature dim, batch padded to B_p.
    obs_p = obs.astype(jnp.bfloat16)
    if B_p != B:
        obs_p = jnp.pad(obs_p, ((0, B_p - B), (0, 0)))

    def pad2(a, rows, cols, dtype):
        a = a if a.ndim == 2 else a.reshape(1, -1)
        return jnp.pad(a, ((0, rows - a.shape[0]),
                           (0, cols - a.shape[1]))).astype(dtype)

    w0_p = pad2(w0, ob_dim, H_p, jnp.bfloat16)
    w1_p = pad2(w1, H_p, H_p, jnp.bfloat16)
    w2_p = pad2(w2, H_p, ac_dim, jnp.bfloat16)
    b0_p = pad2(b0, 1, H_p, jnp.float32)
    b1_p = pad2(b1, 1, H_p, jnp.float32)
    b2_p = pad2(b2, 1, ac_dim, jnp.float32)

    # Weights/biases: constant index_map -> VMEM-resident across grid steps.
    resident = lambda shape: pl.BlockSpec(shape, lambda i: (0, 0))

    # Raise the scoped-VMEM limit only when the footprint needs it
    # (v5e default 16 MiB, v6e/v7x 32 MiB); cap at v7x's 64 MiB physical.
    est_bytes = (2 * TB * (ob_dim * 2 + ac_dim * 4)
                 + 2 * 2 * (ob_dim * H_p + H_p * H_p + H_p * ac_dim)
                 + 2 * 4 * (2 * H_p + ac_dim)
                 + 2 * 4 * TB * H_p)
    vmem_limit = None
    if est_bytes > (16 << 20):
        vmem_limit = min(64 << 20, _round_up(2 * est_bytes, 1 << 20))

    mean_p = pl.pallas_call(
        mlp_policy_kernel,
        grid=grid,
        in_specs=[
            pl.BlockSpec((TB, ob_dim), lambda i: (i, 0)),  # obs (batch-tiled)
            resident((ob_dim, H_p)),                       # W0
            resident((1, H_p)),                            # b0
            resident((H_p, H_p)),                          # W1
            resident((1, H_p)),                            # b1
            resident((H_p, ac_dim)),                       # W2
            resident((1, ac_dim)),                         # b2
        ],
        out_specs=pl.BlockSpec((TB, ac_dim), lambda i: (i, 0)),
        out_shape=jax.ShapeDtypeStruct((B_p, ac_dim), jnp.float32),
        compiler_params=pltpu.CompilerParams(
            dimension_semantics=("parallel",),
            vmem_limit_bytes=vmem_limit),
    )(obs_p, w0_p, b0_p, w1_p, b1_p, w2_p, b2_p)

    mean = mean_p[:B]
    std = jnp.exp(jnp.asarray(logstd, jnp.float32).reshape(1, -1))
    return mean, std


def init_params(key, ob_dim, ac_dim, layer_size):
    """Deterministic parameter init (shapes match MLPPolicy.__init__, n_layers=2)."""
    k0, k1, k2 = jax.random.split(key, 3)
    scale = 0.1
    w0 = scale * jax.random.normal(k0, (ob_dim, layer_size), jnp.float32)
    b0 = jnp.zeros((layer_size,), jnp.float32)
    w1 = scale * jax.random.normal(k1, (layer_size, layer_size), jnp.float32)
    b1 = jnp.zeros((layer_size,), jnp.float32)
    w2 = scale * jax.random.normal(k2, (layer_size, ac_dim), jnp.float32)
    b2 = jnp.zeros((ac_dim,), jnp.float32)
    logstd = jnp.zeros((ac_dim,), jnp.float32)   # nn.Parameter(torch.zeros(ac_dim))
    return (w0, b0, w1, b1, w2, b2, logstd)


def reference_forward(obs, params):
    w0, b0, w1, b1, w2, b2, logstd = params
    h = jnp.tanh(obs @ w0 + b0)
    h = jnp.tanh(h @ w1 + b1)
    mean = h @ w2 + b2
    std = jnp.exp(logstd).reshape(1, -1)
    return mean, std


if __name__ == "__main__":
    # Small shapes consistent with the module's forward:
    # batch=24 observations of dim 16, 2 hidden layers of size 32, ac_dim=4.
    # tile_b=8 forces a multi-step grid so the tiled/pipelined path is exercised.
    B, ob_dim, ac_dim, layer_size = 24, 16, 4, 32

    key = jax.random.PRNGKey(0)
    k_obs, k_params = jax.random.split(key)
    obs = jax.random.normal(k_obs, (B, ob_dim), jnp.float32)
    params = init_params(k_params, ob_dim, ac_dim, layer_size)

    mean, std = mlp_policy_forward(obs, params, tile_b=8)
    mean = jax.block_until_ready(mean)
    std = jax.block_until_ready(std)

    # Correctness check against pure-JAX f32 reference (kernel matmuls run in
    # bf16 with f32 accumulation, hence the relaxed tolerance).
    ref_mean, ref_std = reference_forward(obs, params)
    assert mean.shape == ref_mean.shape and std.shape == ref_std.shape
    assert jnp.allclose(mean, ref_mean, atol=2e-2, rtol=2e-2)
    assert jnp.allclose(std, ref_std, atol=1e-6, rtol=1e-6)

    # TODO(synk): Normal.rsample / Categorical.sample in get_action (and the Adam
    # update) are left to the host; the kernel produces the distribution
    # parameters (mean, std) only.
    print("KERNEL_OK")
</pallas_src>

<mosaic_0001>
module attributes {stable_mosaic.version = 11 : i64} {
  func.func @mlp_policy_kernel(%arg0: i32, %arg1: memref<8x16xbf16, #tpu.memory_space<vmem>>, %arg2: memref<16x128xbf16, #tpu.memory_space<vmem>>, %arg3: memref<1x128xf32, #tpu.memory_space<vmem>>, %arg4: memref<128x128xbf16, #tpu.memory_space<vmem>>, %arg5: memref<1x128xf32, #tpu.memory_space<vmem>>, %arg6: memref<128x4xbf16, #tpu.memory_space<vmem>>, %arg7: memref<1x4xf32, #tpu.memory_space<vmem>>, %arg8: memref<8x4xf32, #tpu.memory_space<vmem>>) attributes {dimension_semantics = [#tpu.dimension_semantics<parallel>], iteration_bounds = array<i64: 3>, scalar_prefetch = 0 : i64, scratch_operands = 0 : i64, tpu.core_type = #tpu.core_type<tc>, window_params = [{transform_indices = @transform_0, window_bounds = array<i64: 8, 16>}, {pipeline_mode = #tpu.pipeline_mode<synchronous>, transform_indices = @transform_1, window_bounds = array<i64: 16, 128>}, {pipeline_mode = #tpu.pipeline_mode<synchronous>, transform_indices = @transform_2, window_bounds = array<i64: 1, 128>}, {pipeline_mode = #tpu.pipeline_mode<synchronous>, transform_indices = @transform_3, window_bounds = array<i64: 128, 128>}, {pipeline_mode = #tpu.pipeline_mode<synchronous>, transform_indices = @transform_4, window_bounds = array<i64: 1, 128>}, {pipeline_mode = #tpu.pipeline_mode<synchronous>, transform_indices = @transform_5, window_bounds = array<i64: 128, 4>}, {pipeline_mode = #tpu.pipeline_mode<synchronous>, transform_indices = @transform_6, window_bounds = array<i64: 1, 4>}, {transform_indices = @transform_7, window_bounds = array<i64: 8, 4>}]} {
    %c0 = arith.constant 0 : index
    %c0_0 = arith.constant 0 : index
    %0 = vector.load %arg1[%c0, %c0_0] : memref<8x16xbf16, #tpu.memory_space<vmem>>, vector<8x16xbf16>
    %c0_1 = arith.constant 0 : index
    %c0_2 = arith.constant 0 : index
    %1 = vector.load %arg2[%c0_1, %c0_2] : memref<16x128xbf16, #tpu.memory_space<vmem>>, vector<16x128xbf16>
    %cst = arith.constant dense<0.000000e+00> : vector<8x128xf32>
    %2 = tpu.matmul %0, %1, %cst {dimension_numbers = #tpu.dot_dimension_numbers<[1], [0], [0], [1], [0, 0, 1, 1], [], []>} : vector<8x16xbf16>, vector<16x128xbf16>, vector<8x128xf32> -> vector<8x128xf32>
    %c0_3 = arith.constant 0 : index
    %c0_4 = arith.constant 0 : index
    %3 = vector.load %arg3[%c0_3, %c0_4] : memref<1x128xf32, #tpu.memory_space<vmem>>, vector<1x128xf32>
    %4 = vector.broadcast %3 : vector<1x128xf32> to vector<8x128xf32>
    %5 = arith.addf %2, %4 : vector<8x128xf32>
    %6 = math.tanh %5 : vector<8x128xf32>
    %7 = arith.truncf %6 : vector<8x128xf32> to vector<8x128xbf16>
    %c0_5 = arith.constant 0 : index
    %c0_6 = arith.constant 0 : index
    %8 = vector.load %arg4[%c0_5, %c0_6] : memref<128x128xbf16, #tpu.memory_space<vmem>>, vector<128x128xbf16>
    %cst_7 = arith.constant dense<0.000000e+00> : vector<8x128xf32>
    %9 = tpu.matmul %7, %8, %cst_7 {dimension_numbers = #tpu.dot_dimension_numbers<[1], [0], [0], [1], [0, 0, 1, 1], [], []>} : vector<8x128xbf16>, vector<128x128xbf16>, vector<8x128xf32> -> vector<8x128xf32>
    %c0_8 = arith.constant 0 : index
    %c0_9 = arith.constant 0 : index
    %10 = vector.load %arg5[%c0_8, %c0_9] : memref<1x128xf32, #tpu.memory_space<vmem>>, vector<1x128xf32>
    %11 = vector.broadcast %10 : vector<1x128xf32> to vector<8x128xf32>
    %12 = arith.addf %9, %11 : vector<8x128xf32>
    %13 = math.tanh %12 : vector<8x128xf32>
    %14 = arith.truncf %13 : vector<8x128xf32> to vector<8x128xbf16>
    %c0_10 = arith.constant 0 : index
    %c0_11 = arith.constant 0 : index
    %15 = vector.load %arg6[%c0_10, %c0_11] : memref<128x4xbf16, #tpu.memory_space<vmem>>, vector<128x4xbf16>
    %cst_12 = arith.constant dense<0.000000e+00> : vector<8x4xf32>
    %16 = tpu.matmul %14, %15, %cst_12 {dimension_numbers = #tpu.dot_dimension_numbers<[1], [0], [0], [1], [0, 0, 1, 1], [], []>} : vector<8x128xbf16>, vector<128x4xbf16>, vector<8x4xf32> -> vector<8x4xf32>
    %c0_13 = arith.constant 0 : index
    %c0_14 = arith.constant 0 : index
    %17 = vector.load %arg7[%c0_13, %c0_14] : memref<1x4xf32, #tpu.memory_space<vmem>>, vector<1x4xf32>
    %18 = vector.broadcast %17 : vector<1x4xf32> to vector<8x4xf32>
    %19 = arith.addf %16, %18 : vector<8x4xf32>
    %c0_15 = arith.constant 0 : index
    %c0_16 = arith.constant 0 : index
    %20 = vector.load %arg8[%c0_15, %c0_16] : memref<8x4xf32, #tpu.memory_space<vmem>>, vector<8x4xf32>
    tpu.vector_store %arg8[%c0_15, %c0_16], %19 {strides = array<i32>} : memref<8x4xf32, #tpu.memory_space<vmem>>, vector<8x4xf32>,
    return
  }
  func.func @transform_0(%arg0: i32) -> (i32, i32) {
    %c0_i32 = arith.constant 0 : i32
    %c0_i32_0 = arith.constant 0 : i32
    return %arg0, %c0_i32 : i32, i32
  }
  func.func @transform_1(%arg0: i32) -> (i32, i32) {
    %c0_i32 = arith.constant 0 : i32
    %c0_i32_0 = arith.constant 0 : i32
    %c0_i32_1 = arith.constant 0 : i32
    return %c0_i32, %c0_i32_0 : i32, i32
  }
  func.func @transform_2(%arg0: i32) -> (i32, i32) {
    %c0_i32 = arith.constant 0 : i32
    %c0_i32_0 = arith.constant 0 : i32
    %c0_i32_1 = arith.constant 0 : i32
    return %c0_i32, %c0_i32_0 : i32, i32
  }
  func.func @transform_3(%arg0: i32) -> (i32, i32) {
    %c0_i32 = arith.constant 0 : i32
    %c0_i32_0 = arith.constant 0 : i32
    %c0_i32_1 = arith.constant 0 : i32
    return %c0_i32, %c0_i32_0 : i32, i32
  }
  func.func @transform_4(%arg0: i32) -> (i32, i32) {
    %c0_i32 = arith.constant 0 : i32
    %c0_i32_0 = arith.constant 0 : i32
    %c0_i32_1 = arith.constant 0 : i32
    return %c0_i32, %c0_i32_0 : i32, i32
  }
  func.func @transform_5(%arg0: i32) -> (i32, i32) {
    %c0_i32 = arith.constant 0 : i32
    %c0_i32_0 = arith.constant 0 : i32
    %c0_i32_1 = arith.constant 0 : i32
    return %c0_i32, %c0_i32_0 : i32, i32
  }
  func.func @transform_6(%arg0: i32) -> (i32, i32) {
    %c0_i32 = arith.constant 0 : i32
    %c0_i32_0 = arith.constant 0 : i32
    %c0_i32_1 = arith.constant 0 : i32
    return %c0_i32, %c0_i32_0 : i32, i32
  }
  func.func @transform_7(%arg0: i32) -> (i32, i32) {
    %c0_i32 = arith.constant 0 : i32
    %c0_i32_0 = arith.constant 0 : i32
    return %arg0, %c0_i32 : i32, i32
  }
}

</mosaic_0001>

<llo_original>
// kernel: tpu_custom_call.1
$region0: #{tpu_custom_call.1}
  #allocation0 [shape = 'u32[]', space=smem, size = 0x4, offset = 0x4, fixed_abs, tag = 'smem constant byte address 0x4 - core index']
  #allocation1 [shape = 'u32[144,128]{1,0:T(1,128)}', space=vmem, size = 0x12000, scoped, tag = 'internal scratch']
  %s0 = inlined_call_operand.vmem [shape: bf16[24,16], index: 0, kind: input, shape index: {}]
  %s1 = inlined_call_operand.vmem [shape: bf16[16,128], index: 1, kind: input, shape index: {}]
  %s2 = inlined_call_operand.vmem [shape: f32[1,128], index: 2, kind: input, shape index: {}]
  %s3 = inlined_call_operand.vmem [shape: bf16[128,128], index: 3, kind: input, shape index: {}]
  %s4 = inlined_call_operand.vmem [shape: f32[1,128], index: 4, kind: input, shape index: {}]
  %s5 = inlined_call_operand.vmem [shape: bf16[128,4], index: 5, kind: input, shape index: {}]
  %s6 = inlined_call_operand.vmem [shape: f32[1,4], index: 6, kind: input, shape index: {}]
  %s7 = inlined_call_operand.vmem [shape: f32[24,4], index: 7, kind: output, shape index: {}]
  %s8 = sld [smem:[#allocation0]]
  $region61: #{tpu_custom_call.1} parent=0
    _
  %s10 = ssub.s32 1, %s8
  %s11 = scalar_select 0, %s10, %s8
  loop: start=0, step=1, limit=5
  $region2: #{tpu_custom_call.1} parent=0 // loop_pre_header
    _
  $region3: #{tpu_custom_call.1} parent=0 // loop_header
    %s13 = sphi 0, %s17
    %p14 = scmp.ge.s32.totalorder %s13, 5
    %s23 = sphi 0, %s25
    %s26 = sphi 0, %s23
    %s27 = sphi 0, %s26
    %s43 = sphi 0, %s27
    %s47 = sphi 0, %s47
    %s49 = sphi 0, %s47
    %s50 = sphi 0, %s49
    %s64 = sphi 0, %s50
    %s68 = sphi 0, %s68
    %s70 = sphi 0, %s68
    %s71 = sphi 0, %s70
    %s85 = sphi 0, %s71
    %s89 = sphi 0, %s89
    %s91 = sphi 0, %s89
    %s92 = sphi 0, %s91
    %s106 = sphi 0, %s92
    %s110 = sphi 0, %s110
    %s112 = sphi 0, %s110
    %s113 = sphi 0, %s112
    %s127 = sphi 0, %s113
    %s131 = sphi 0, %s131
    %s133 = sphi 0, %s131
    %s134 = sphi 0, %s133
    %s148 = sphi 0, %s134
    %s152 = sphi 0, %s152
    %s154 = sphi 0, %s152
    %s155 = sphi 0, %s154
    %s169 = sphi 0, %s155
    %s175 = sphi 0, %s177
    %s178 = sphi 0, %s175
    %s179 = sphi 0, %s178
    %s195 = sphi 0, %s179
  $region4: #{tpu_custom_call.1} parent=0 // loop_header_branch
    %16 = sbr.rel (%p14) target = $region8
  $region5: #{tpu_custom_call.1} parent=0 // loop_body
    %s18 = ssub.s32 %s13, 1
    %s19 = ssub.s32 %s13, 2
    %s20 = sadd.s32 %s13, 1
    %s21 = ssub.s32 %s13, %s20
    %p22 = scmp.eq.s32.totalorder %s21, 0
    %s24 = sadd.s32 %s23, 1
    %s25 = scalar_select %p22, %s23, %s24
    %p28 = pneg %p22
    %p29 = scmp.eq.s32.totalorder %s13, 2
    %p30 = por %p28, %p29
    %p31 = scmp.ne.s32.totalorder %s23, %s26
    %p32 = scmp.eq.s32.totalorder %s13, 0
    %p33 = por %p31, %p32
    %p34 = scmp.ne.s32.totalorder %s23, %s26
    %p35 = scmp.eq.s32.totalorder %s18, 2
    %p36 = por %p34, %p35
    %p37 = scmp.ne.s32.totalorder %s26, %s27
    %p38 = scmp.eq.s32.totalorder %s18, 0
    %p39 = por %p37, %p38
    %p40 = scmp.ne.s32.totalorder %s26, %s27
    %p41 = scmp.eq.s32.totalorder %s19, 2
    %p42 = por %p40, %p41
    %p44 = scmp.ne.s32.totalorder %s27, %s43
    %p45 = scmp.eq.s32.totalorder %s19, 0
    %p46 = por %p44, %p45
    %s48 = sadd.s32 %s47, 1
    %p51 = scmp.eq.s32.totalorder %s13, 2
    %p52 = scmp.ne.s32.totalorder %s47, %s49
    %p53 = scmp.eq.s32.totalorder %s13, 0
    %p54 = por %p52, %p53
    %p55 = scmp.ne.s32.totalorder %s47, %s49
    %p56 = scmp.eq.s32.totalorder %s18, 2
    %p57 = por %p55, %p56
    %p58 = scmp.ne.s32.totalorder %s49, %s50
    %p59 = scmp.eq.s32.totalorder %s18, 0
    %p60 = por %p58, %p59
    %p61 = scmp.ne.s32.totalorder %s49, %s50
    %p62 = scmp.eq.s32.totalorder %s19, 2
    %p63 = por %p61, %p62
    %p65 = scmp.ne.s32.totalorder %s50, %s64
    %p66 = scmp.eq.s32.totalorder %s19, 0
    %p67 = por %p65, %p66
    %s69 = sadd.s32 %s68, 1
    %p72 = scmp.eq.s32.totalorder %s13, 2
    %p73 = scmp.ne.s32.totalorder %s68, %s70
    %p74 = scmp.eq.s32.totalorder %s13, 0
    %p75 = por %p73, %p74
    %p76 = scmp.ne.s32.totalorder %s68, %s70
    %p77 = scmp.eq.s32.totalorder %s18, 2
    %p78 = por %p76, %p77
    %p79 = scmp.ne.s32.totalorder %s70, %s71
    %p80 = scmp.eq.s32.totalorder %s18, 0
    %p81 = por %p79, %p80
    %p82 = scmp.ne.s32.totalorder %s70, %s71
    %p83 = scmp.eq.s32.totalorder %s19, 2
    %p84 = por %p82, %p83
    %p86 = scmp.ne.s32.totalorder %s71, %s85
    %p87 = scmp.eq.s32.totalorder %s19, 0
    %p88 = por %p86, %p87
    %s90 = sadd.s32 %s89, 1
    %p93 = scmp.eq.s32.totalorder %s13, 2
    %p94 = scmp.ne.s32.totalorder %s89, %s91
    %p95 = scmp.eq.s32.totalorder %s13, 0
    %p96 = por %p94, %p95
    %p97 = scmp.ne.s32.totalorder %s89, %s91
    %p98 = scmp.eq.s32.totalorder %s18, 2
    %p99 = por %p97, %p98
    %p100 = scmp.ne.s32.totalorder %s91, %s92
    %p101 = scmp.eq.s32.totalorder %s18, 0
    %p102 = por %p100, %p101
    %p103 = scmp.ne.s32.totalorder %s91, %s92
    %p104 = scmp.eq.s32.totalorder %s19, 2
    %p105 = por %p103, %p104
    %p107 = scmp.ne.s32.totalorder %s92, %s106
    %p108 = scmp.eq.s32.totalorder %s19, 0
    %p109 = por %p107, %p108
    %s111 = sadd.s32 %s110, 1
    %p114 = scmp.eq.s32.totalorder %s13, 2
    %p115 = scmp.ne.s32.totalorder %s110, %s112
    %p116 = scmp.eq.s32.totalorder %s13, 0
    %p117 = por %p115, %p116
    %p118 = scmp.ne.s32.totalorder %s110, %s112
    %p119 = scmp.eq.s32.totalorder %s18, 2
    %p120 = por %p118, %p119
    %p121 = scmp.ne.s32.totalorder %s112, %s113
    %p122 = scmp.eq.s32.totalorder %s18, 0
    %p123 = por %p121, %p122
    %p124 = scmp.ne.s32.totalorder %s112, %s113
    %p125 = scmp.eq.s32.totalorder %s19, 2
    %p126 = por %p124, %p125
    %p128 = scmp.ne.s32.totalorder %s113, %s127
    %p129 = scmp.eq.s32.totalorder %s19, 0
    %p130 = por %p128, %p129
    %s132 = sadd.s32 %s131, 1
    %p135 = scmp.eq.s32.totalorder %s13, 2
    %p136 = scmp.ne.s32.totalorder %s131, %s133
    %p137 = scmp.eq.s32.totalorder %s13, 0
    %p138 = por %p136, %p137
    %p139 = scmp.ne.s32.totalorder %s131, %s133
    %p140 = scmp.eq.s32.totalorder %s18, 2
    %p141 = por %p139, %p140
    %p142 = scmp.ne.s32.totalorder %s133, %s134
    %p143 = scmp.eq.s32.totalorder %s18, 0
    %p144 = por %p142, %p143
    %p145 = scmp.ne.s32.totalorder %s133, %s134
    %p146 = scmp.eq.s32.totalorder %s19, 2
    %p147 = por %p145, %p146
    %p149 = scmp.ne.s32.totalorder %s134, %s148
    %p150 = scmp.eq.s32.totalorder %s19, 0
    %p151 = por %p149, %p150
    %s153 = sadd.s32 %s152, 1
    %p156 = scmp.eq.s32.totalorder %s13, 2
    %p157 = scmp.ne.s32.totalorder %s152, %s154
    %p158 = scmp.eq.s32.totalorder %s13, 0
    %p159 = por %p157, %p158
    %p160 = scmp.ne.s32.totalorder %s152, %s154
    %p161 = scmp.eq.s32.totalorder %s18, 2
    %p162 = por %p160, %p161
    %p163 = scmp.ne.s32.totalorder %s154, %s155
    %p164 = scmp.eq.s32.totalorder %s18, 0
    %p165 = por %p163, %p164
    %p166 = scmp.ne.s32.totalorder %s154, %s155
    %p167 = scmp.eq.s32.totalorder %s19, 2
    %p168 = por %p166, %p167
    %p170 = scmp.ne.s32.totalorder %s155, %s169
    %p171 = scmp.eq.s32.totalorder %s19, 0
    %p172 = por %p170, %p171
    %s173 = ssub.s32 %s13, %s20
    %p174 = scmp.eq.s32.totalorder %s173, 0
    %s176 = sadd.s32 %s175, 1
    %s177 = scalar_select %p174, %s175, %s176
    %p180 = pneg %p174
    %p181 = scmp.eq.s32.totalorder %s13, 2
    %p182 = por %p180, %p181
    %p183 = scmp.ne.s32.totalorder %s175, %s178
    %p184 = scmp.eq.s32.totalorder %s13, 0
    %p185 = por %p183, %p184
    %p186 = scmp.ne.s32.totalorder %s175, %s178
    %p187 = scmp.eq.s32.totalorder %s18, 2
    %p188 = por %p186, %p187
    %p189 = scmp.ne.s32.totalorder %s178, %s179
    %p190 = scmp.eq.s32.totalorder %s18, 0
    %p191 = por %p189, %p190
    %p192 = scmp.ne.s32.totalorder %s178, %s179
    %p193 = scmp.eq.s32.totalorder %s19, 2
    %p194 = por %p192, %p193
    %p196 = scmp.ne.s32.totalorder %s179, %s195
    %p197 = scmp.eq.s32.totalorder %s19, 0
    %p198 = por %p196, %p197
    %p199 = scmp.le.s32.totalorder 1, %s13
    %p200 = scmp.lt.s32.totalorder %s13, 4
    %p201 = pnand %p199, %p200
    %p202 = pneg %p201
    // Predicated region
    $region9: #{tpu_custom_call.1} parent=5 // pred_check
      _
    $region10: #{tpu_custom_call.1} parent=5 // pred_check_branch
      %204 = sbr.rel (%p201) target = $region12
    $region11: #{tpu_custom_call.1} parent=5 // pred_region
      %s205 = ssub.s32 %s13, 1
      // Predicated region
      $region13: #{tpu_custom_call.1} parent=11 // pred_check
        %p206 = pneg %p60
      $region14: #{tpu_custom_call.1} parent=11 // pred_check_branch
        %208 = sbr.rel (%p206) target = $region16
      $region15: #{tpu_custom_call.1} parent=11 // pred_region
        _
      $region16: #{tpu_custom_call.1} parent=11 // pred_fallthru
        _
      // Predicated region
      $region17: #{tpu_custom_call.1} parent=11 // pred_check
        %p209 = pneg %p81
      $region18: #{tpu_custom_call.1} parent=11 // pred_check_branch
        %211 = sbr.rel (%p209) target = $region20
      $region19: #{tpu_custom_call.1} parent=11 // pred_region
        _
      $region20: #{tpu_custom_call.1} parent=11 // pred_fallthru
        _
      // Predicated region
      $region21: #{tpu_custom_call.1} parent=11 // pred_check
        %p212 = pneg %p102
      $region22: #{tpu_custom_call.1} parent=11 // pred_check_branch
        %214 = sbr.rel (%p212) target = $region24
      $region23: #{tpu_custom_call.1} parent=11 // pred_region
        _
      $region24: #{tpu_custom_call.1} parent=11 // pred_fallthru
        _
      // Predicated region
      $region25: #{tpu_custom_call.1} parent=11 // pred_check
        %p215 = pneg %p123
      $region26: #{tpu_custom_call.1} parent=11 // pred_check_branch
        %217 = sbr.rel (%p215) target = $region28
      $region27: #{tpu_custom_call.1} parent=11 // pred_region
        _
      $region28: #{tpu_custom_call.1} parent=11 // pred_fallthru
        _
      // Predicated region
      $region29: #{tpu_custom_call.1} parent=11 // pred_check
        %p218 = pneg %p144
      $region30: #{tpu_custom_call.1} parent=11 // pred_check_branch
        %220 = sbr.rel (%p218) target = $region32
      $region31: #{tpu_custom_call.1} parent=11 // pred_region
        _
      $region32: #{tpu_custom_call.1} parent=11 // pred_fallthru
        _
      // Predicated region
      $region33: #{tpu_custom_call.1} parent=11 // pred_check
        %p221 = pneg %p165
      $region34: #{tpu_custom_call.1} parent=11 // pred_check_branch
        %223 = sbr.rel (%p221) target = $region36
      $region35: #{tpu_custom_call.1} parent=11 // pred_region
        _
      $region36: #{tpu_custom_call.1} parent=11 // pred_fallthru
        _
    $region12: #{tpu_custom_call.1} parent=5 // pred_fallthru
      _
    %p224 = scmp.lt.s32.totalorder %s13, 3
    // Predicated region
    $region37: #{tpu_custom_call.1} parent=5 // pred_check
      %p225 = pneg %p224
    $region38: #{tpu_custom_call.1} parent=5 // pred_check_branch
      %227 = sbr.rel (%p225) target = $region40
    $region39: #{tpu_custom_call.1} parent=5 // pred_region
      // Predicated region
      $region41: #{tpu_custom_call.1} parent=39 // pred_check
        %p228 = pneg %p33
      $region42: #{tpu_custom_call.1} parent=39 // pred_check_branch
        %230 = sbr.rel (%p228) target = $region44
      $region43: #{tpu_custom_call.1} parent=39 // pred_region
        %p231 = scmp.lt.s32.totalorder %s13, 2
        %s232 = scalar_select %p231, %s13, 2
        %s233 = smul.addr %s232, 4
        %s234 = scalar_lea.vmem %s0, %s233
      $region44: #{tpu_custom_call.1} parent=39 // pred_fallthru
        _
    $region40: #{tpu_custom_call.1} parent=5 // pred_fallthru
      _
    %p235 = scmp.le.s32.totalorder 1, %s13
    %p236 = scmp.lt.s32.totalorder %s13, 4
    %p237 = pnand %p235, %p236
    %p238 = pneg %p237
    // Predicated region
    $region45: #{tpu_custom_call.1} parent=5 // pred_check
      _
    $region46: #{tpu_custom_call.1} parent=5 // pred_check_branch
      %240 = sbr.rel (%p237) target = $region48
    $region47: #{tpu_custom_call.1} parent=5 // pred_region
      %s241 = ssub.s32 %s13, 1
      %p242 = scmp.lt.s32.totalorder %s18, 2
      %s243 = scalar_select %p242, %s18, 2
      %s244 = smul.addr %s243, 4
      %s245 = scalar_lea.vmem %s0, %s244
      %p246 = pneg %p39
      %p247 = pneg %p36
      %p248 = pneg %p60
      %p249 = pneg %p57
      %p250 = pneg %p81
      %p251 = pneg %p78
      %p252 = pneg %p102
      %p253 = pneg %p99
      %p254 = pneg %p123
      %p255 = pneg %p120
      %p256 = pneg %p144
      %p257 = pneg %p141
      %p258 = pneg %p165
      %p259 = pneg %p162
      %p260 = pneg %p191
      %p261 = pneg %p188
      %p262 = scmp.lt.s32.totalorder %s18, 2
      %s263 = scalar_select %p262, %s18, 2
      %s264 = smul.addr %s263, 8
      %s265 = scalar_lea.vmem %s7, %s264
      %p266 = scmp.lt.s32.totalorder %s18, 2
      %s267 = scalar_select %p266, %s18, 2
      %s268 = smul.addr %s267, 4
      %s269 = scalar_lea.vmem %s0, %s268
      %p270 = scmp.lt.s32.totalorder %s18, 2
      %s271 = scalar_select %p270, %s18, 2
      %s272 = smul.addr %s271, 8
      %s273 = scalar_lea.vmem %s7, %s272
      %v275 = vld [vmem:[%s269] sm:$0xf]
      %v276 = vld [vmem:[%s1] sm:$0xf]
      %v277 = vld [vmem:[%s1 + $0x4] sm:$0xf]
      %v278 = vld [vmem:[%s2] sm:$0x1]
      %v280 = vlaneseq
      %v281 = vshrl.u32 %v280, 7
      %v282 = vsub.s32 0, %v281
      %v283 = vrot.slane %v278, %v282
      %v287 = vunpack.c.l.b16 %v276
      %v288 = vunpack.c.l.b16 %v277
      %v289 = vpack.c.b16 %v288, %v287
      %vm291 = vcmask 130048
      %v293 = vsel %vm291, %v275, 0
      %295 = vmatprep.subr.bf16.mxu0 0
      %296 = vmatpush1.bf16.msra.mxu0 0
      %297 = vmatprep.subr.bf16.mxu0 0
      %298 = vmatpush1.bf16.msra.mxu0 0
      %299 = vmatprep.subr.bf16.mxu0 0
      %300 = vmatpush1.bf16.msra.mxu0 0
      %301 = vmatprep.subr.bf16.mxu0 0
      %302 = vmatpush1.bf16.msra.mxu0 0
      %303 = vmatprep.subr.bf16.mxu0 0
      %304 = vmatpush1.bf16.msra.mxu0 0
      %305 = vmatprep.subr.bf16.mxu0 0
      %306 = vmatpush1.bf16.msra.mxu0 0
      %307 = vmatprep.subr.bf16.mxu0 0
      %308 = vmatpush1.bf16.msra.mxu0 0
      %309 = vmatprep.subr.bf16.mxu0 0
      %310 = vmatpush1.bf16.msra.mxu0 %v289
      %311 = vmatprep.subr.bf16.mxu0 0
      %312 = vmatpush2.bf16.msra.mxu0 0
      %313 = vmatprep.subr.bf16.mxu0 0
      %314 = vmatpush2.bf16.msra.mxu0 0
      %315 = vmatprep.subr.bf16.mxu0 0
      %316 = vmatpush2.bf16.msra.mxu0 0
      %317 = vmatprep.subr.bf16.mxu0 0
      %318 = vmatpush2.bf16.msra.mxu0 0
      %319 = vmatprep.subr.bf16.mxu0 0
      %320 = vmatpush2.bf16.msra.mxu0 0
      %321 = vmatprep.subr.bf16.mxu0 0
      %322 = vmatpush2.bf16.msra.mxu0 0
      %323 = vmatprep.subr.bf16.mxu0 0
      %324 = vmatpush2.bf16.msra.mxu0 0
      %325 = vmatprep.subr.bf16.mxu0 0
      %326 = vmatpush2.bf16.msra.mxu0 0
      %327 = vmatprep.mubr.bf16.mxu0 0
      %328 = vmatmul.mubr.bf16.gmra.mxu0 %v293
      %v329 = vpop.f32.mrf.mxu0
      %v330 = vadd.f32 %v283, %v329
      %v331 = vpop.f32.mrf.mxu0
      %v332 = vpop.f32.mrf.mxu0
      %v333 = vpop.f32.mrf.mxu0
      %334 = vdwg.mxu0
      %v335 = vtanh.pop %v330
      %v336 = vpack.c.bf16 %v335, %v335
      %v337 = vld [vmem:[%s3] sm:$0xf]
      %v338 = vld [vmem:[%s3 + $0x4] sm:$0xf]
      %v339 = vld [vmem:[%s3 + $0x8] sm:$0xf]
      %v340 = vld [vmem:[%s3 + $0xc] sm:$0xf]
      %v341 = vld [vmem:[%s3 + $0x10] sm:$0xf]
      %v342 = vld [vmem:[%s3 + $0x14] sm:$0xf]
      %v343 = vld [vmem:[%s3 + $0x18] sm:$0xf]
      %v344 = vld [vmem:[%s3 + $0x1c] sm:$0xf]
      %v345 = vld [vmem:[%s3 + $0x20] sm:$0xf]
      %v346 = vld [vmem:[%s3 + $0x24] sm:$0xf]
      %v347 = vld [vmem:[%s3 + $0x28] sm:$0xf]
      %v348 = vld [vmem:[%s3 + $0x2c] sm:$0xf]
      %v349 = vld [vmem:[%s3 + $0x30] sm:$0xf]
      %v350 = vld [vmem:[%s3 + $0x34] sm:$0xf]
      %v351 = vld [vmem:[%s3 + $0x38] sm:$0xf]
      %v352 = vld [vmem:[%s3 + $0x3c] sm:$0xf]
      %v353 = vld [vmem:[%s4] sm:$0x1]
      %v355 = vlaneseq
      %v356 = vshrl.u32 %v355, 7
      %v357 = vsub.s32 0, %v356
      %v358 = vrot.slane %v353, %v357
      %v376 = vunpack.c.l.b16 %v337
      %v377 = vunpack.c.l.b16 %v338
      %v378 = vunpack.c.l.b16 %v339
      %v379 = vunpack.c.l.b16 %v340
      %v380 = vunpack.c.l.b16 %v341
      %v381 = vunpack.c.l.b16 %v342
      %v382 = vunpack.c.l.b16 %v343
      %v383 = vunpack.c.l.b16 %v344
      %v384 = vunpack.c.l.b16 %v345
      %v385 = vunpack.c.l.b16 %v346
      %v386 = vunpack.c.l.b16 %v347
      %v387 = vunpack.c.l.b16 %v348
      %v388 = vunpack.c.l.b16 %v349
      %v389 = vunpack.c.l.b16 %v350
      %v390 = vunpack.c.l.b16 %v351
      %v391 = vunpack.c.l.b16 %v352
      %v392 = vpack.c.b16 %v377, %v376
      %v393 = vpack.c.b16 %v379, %v378
      %v394 = vpack.c.b16 %v381, %v380
      %v395 = vpack.c.b16 %v383, %v382
      %v396 = vpack.c.b16 %v385, %v384
      %v397 = vpack.c.b16 %v387, %v386
      %v398 = vpack.c.b16 %v389, %v388
      %v399 = vpack.c.b16 %v391, %v390
      %408 = vmatprep.subr.bf16.mxu0 0
      %409 = vmatpush1.bf16.msra.mxu0 %v399
      %410 = vmatprep.subr.bf16.mxu0 0
      %411 = vmatpush1.bf16.msra.mxu0 %v398
      %412 = vmatprep.subr.bf16.mxu0 0
      %413 = vmatpush1.bf16.msra.mxu0 %v397
      %414 = vmatprep.subr.bf16.mxu0 0
      %415 = vmatpush1.bf16.msra.mxu0 %v396
      %416 = vmatprep.subr.bf16.mxu0 0
      %417 = vmatpush1.bf16.msra.mxu0 %v395
      %418 = vmatprep.subr.bf16.mxu0 0
      %419 = vmatpush1.bf16.msra.mxu0 %v394
      %420 = vmatprep.subr.bf16.mxu0 0
      %421 = vmatpush1.bf16.msra.mxu0 %v393
      %422 = vmatprep.subr.bf16.mxu0 0
      %423 = vmatpush1.bf16.msra.mxu0 %v392
      %424 = vmatprep.subr.bf16.mxu0 0
      %425 = vmatpush2.bf16.msra.mxu0 0
      %426 = vmatprep.subr.bf16.mxu0 0
      %427 = vmatpush2.bf16.msra.mxu0 0
      %428 = vmatprep.subr.bf16.mxu0 0
      %429 = vmatpush2.bf16.msra.mxu0 0
      %430 = vmatprep.subr.bf16.mxu0 0
      %431 = vmatpush2.bf16.msra.mxu0 0
      %432 = vmatprep.subr.bf16.mxu0 0
      %433 = vmatpush2.bf16.msra.mxu0 0
      %434 = vmatprep.subr.bf16.mxu0 0
      %435 = vmatpush2.bf16.msra.mxu0 0
      %436 = vmatprep.subr.bf16.mxu0 0
      %437 = vmatpush2.bf16.msra.mxu0 0
      %438 = vmatprep.subr.bf16.mxu0 0
      %439 = vmatpush2.bf16.msra.mxu0 0
      %440 = vmatprep.mubr.bf16.mxu0 0
      %441 = vmatmul.mubr.bf16.gmra.mxu0 %v336
      %v442 = vpop.f32.mrf.mxu0
      %v443 = vadd.f32 %v358, %v442
      %v444 = vpop.f32.mrf.mxu0
      %v445 = vpop.f32.mrf.mxu0
      %v446 = vpop.f32.mrf.mxu0
      %447 = vdwg.mxu0
      %v448 = vtanh.pop %v443
      %v449 = vpack.c.bf16 %v448, %v448
      %v450 = vld [vmem:[%s5] sm:$0xf]
      %v451 = vld [vmem:[%s5 + $0x4] sm:$0xf]
      %v452 = vld [vmem:[%s5 + $0x8] sm:$0xf]
      %v453 = vld [vmem:[%s5 + $0xc] sm:$0xf]
      %v454 = vld [vmem:[%s5 + $0x10] sm:$0xf]
      %v455 = vld [vmem:[%s5 + $0x14] sm:$0xf]
      %v456 = vld [vmem:[%s5 + $0x18] sm:$0xf]
      %v457 = vld [vmem:[%s5 + $0x1c] sm:$0xf]
      %v458 = vld [vmem:[%s5 + $0x20] sm:$0xf]
      %v459 = vld [vmem:[%s5 + $0x24] sm:$0xf]
      %v460 = vld [vmem:[%s5 + $0x28] sm:$0xf]
      %v461 = vld [vmem:[%s5 + $0x2c] sm:$0xf]
      %v462 = vld [vmem:[%s5 + $0x30] sm:$0xf]
      %v463 = vld [vmem:[%s5 + $0x34] sm:$0xf]
      %v464 = vld [vmem:[%s5 + $0x38] sm:$0xf]
      %v465 = vld [vmem:[%s5 + $0x3c] sm:$0xf]
      %v466 = vld [vmem:[%s6] sm:$0x1]
      %v468 = vlaneseq
      %v469 = vshrl.u32 %v468, 7
      %v470 = vsub.s32 0, %v469
      %v471 = vrot.slane %v466, %v470
      %v489 = vunpack.c.l.b16 %v450
      %v490 = vunpack.c.l.b16 %v451
      %v491 = vunpack.c.l.b16 %v452
      %v492 = vunpack.c.l.b16 %v453
      %v493 = vunpack.c.l.b16 %v454
      %v494 = vunpack.c.l.b16 %v455
      %v495 = vunpack.c.l.b16 %v456
      %v496 = vunpack.c.l.b16 %v457
      %v497 = vunpack.c.l.b16 %v458
      %v498 = vunpack.c.l.b16 %v459
      %v499 = vunpack.c.l.b16 %v460
      %v500 = vunpack.c.l.b16 %v461
      %v501 = vunpack.c.l.b16 %v462
      %v502 = vunpack.c.l.b16 %v463
      %v503 = vunpack.c.l.b16 %v464
      %v504 = vunpack.c.l.b16 %v465
      %v505 = vpack.c.b16 %v490, %v489
      %v506 = vpack.c.b16 %v492, %v491
      %v507 = vpack.c.b16 %v494, %v493
      %v508 = vpack.c.b16 %v496, %v495
      %v509 = vpack.c.b16 %v498, %v497
      %v510 = vpack.c.b16 %v500, %v499
      %v511 = vpack.c.b16 %v502, %v501
      %v512 = vpack.c.b16 %v504, %v503
      %521 = vmatprep.subr.bf16.mxu0 0
      %522 = vmatpush1.bf16.msra.mxu0 %v512
      %523 = vmatprep.subr.bf16.mxu0 0
      %524 = vmatpush1.bf16.msra.mxu0 %v511
      %525 = vmatprep.subr.bf16.mxu0 0
      %526 = vmatpush1.bf16.msra.mxu0 %v510
      %527 = vmatprep.subr.bf16.mxu0 0
      %528 = vmatpush1.bf16.msra.mxu0 %v509
      %529 = vmatprep.subr.bf16.mxu0 0
      %530 = vmatpush1.bf16.msra.mxu0 %v508
      %531 = vmatprep.subr.bf16.mxu0 0
      %532 = vmatpush1.bf16.msra.mxu0 %v507
      %533 = vmatprep.subr.bf16.mxu0 0
      %534 = vmatpush1.bf16.msra.mxu0 %v506
      %535 = vmatprep.subr.bf16.mxu0 0
      %536 = vmatpush1.bf16.msra.mxu0 %v505
      %537 = vmatprep.subr.bf16.mxu0 0
      %538 = vmatpush2.bf16.msra.mxu0 0
      %539 = vmatprep.subr.bf16.mxu0 0
      %540 = vmatpush2.bf16.msra.mxu0 0
      %541 = vmatprep.subr.bf16.mxu0 0
      %542 = vmatpush2.bf16.msra.mxu0 0
      %543 = vmatprep.subr.bf16.mxu0 0
      %544 = vmatpush2.bf16.msra.mxu0 0
      %545 = vmatprep.subr.bf16.mxu0 0
      %546 = vmatpush2.bf16.msra.mxu0 0
      %547 = vmatprep.subr.bf16.mxu0 0
      %548 = vmatpush2.bf16.msra.mxu0 0
      %549 = vmatprep.subr.bf16.mxu0 0
      %550 = vmatpush2.bf16.msra.mxu0 0
      %551 = vmatprep.subr.bf16.mxu0 0
      %552 = vmatpush2.bf16.msra.mxu0 0
      %553 = vmatprep.mubr.bf16.mxu0 0
      %554 = vmatmul.mubr.bf16.gmra.mxu0 %v449
      %v555 = vpop.f32.mrf.mxu0
      %v556 = vadd.f32 %v471, %v555
      %v557 = vpop.f32.mrf.mxu0
      %v558 = vpop.f32.mrf.mxu0
      %v559 = vpop.f32.mrf.mxu0
      %560 = vdwg.mxu0
      %vm561 = vcmask 31744
      %562 = vst.msk [vmem:[%s273] sm:$0xff] %vm561, %v556
      %p563 = scmp.lt.s32.totalorder %s18, 2
      %s564 = scalar_select %p563, %s18, 2
      %s565 = smul.addr %s564, 8
      %s566 = scalar_lea.vmem %s7, %s565
      // Predicated region
      $region49: #{tpu_custom_call.1} parent=47 // pred_check
        %p567 = pneg %p188
      $region50: #{tpu_custom_call.1} parent=47 // pred_check_branch
        %569 = sbr.rel (%p567) target = $region52
      $region51: #{tpu_custom_call.1} parent=47 // pred_region
        _
      $region52: #{tpu_custom_call.1} parent=47 // pred_fallthru
        _
    $region48: #{tpu_custom_call.1} parent=5 // pred_fallthru
      _
    %p570 = scmp.le.s32.totalorder 2, %s13
    // Predicated region
    $region53: #{tpu_custom_call.1} parent=5 // pred_check
      %p571 = pneg %p570
    $region54: #{tpu_custom_call.1} parent=5 // pred_check_branch
      %573 = sbr.rel (%p571) target = $region56
    $region55: #{tpu_custom_call.1} parent=5 // pred_region
      %s574 = ssub.s32 %s13, 2
      // Predicated region
      $region57: #{tpu_custom_call.1} parent=55 // pred_check
        %p575 = pneg %p194
      $region58: #{tpu_custom_call.1} parent=55 // pred_check_branch
        %577 = sbr.rel (%p575) target = $region60
      $region59: #{tpu_custom_call.1} parent=55 // pred_region
        %p578 = scmp.lt.s32.totalorder %s19, 2
        %s579 = scalar_select %p578, %s19, 2
        %s580 = smul.addr %s579, 8
        %s581 = scalar_lea.vmem %s7, %s580
      $region60: #{tpu_custom_call.1} parent=55 // pred_fallthru
        _
    $region56: #{tpu_custom_call.1} parent=5 // pred_fallthru
      _
  $region6: #{tpu_custom_call.1} parent=0 // loop_footer
    %s17 = sadd.s32 1, %s13
  $region7: #{tpu_custom_call.1} parent=0 // loop_footer_branch
    %12 = sbr.rel target = $region3
  $region8: #{tpu_custom_call.1} parent=0 // loop_exit
    _

</llo_original>
